<compile_context>
chip_gen: v7x
topology: tpu7x:2x2x1
jax: 0.10.0
libtpu: 0.0.40
codegen_flags: <defaults>
</compile_context>

<pallas_src>
import functools

import jax
import jax.numpy as jnp
from jax.experimental import pallas as pl
from jax.experimental.pallas import tpu as pltpu


def _round_up(x, m):
    return ((x + m - 1) // m) * m


def _sublane_pack(itemsize):
    # Rows per packed sublane group: f32/int32 -> 8, bf16 -> 16, int8/fp8 -> 32.
    return 8 * max(1, 4 // max(1, itemsize))


def _vmem_capacity_bytes():
    try:
        return int(pltpu.get_tpu_info().vmem_capacity_bytes)
    except Exception:
        return 64 * 1024 * 1024  # conservative: v7x per-TensorCore VMEM


def _choose_block_rows(rows, vocab_pad, logits_itemsize, pack, *,
                       target_tile_bytes=8 * 1024 * 1024,
                       max_rows=32768, min_blocks=8):
    """Largest row tile (multiple of `pack`) with ~target_tile_bytes of logits,
    capped so the grid keeps >= min_blocks steps when the row count allows."""
    br = target_tile_bytes // max(1, vocab_pad * logits_itemsize)
    br = max(pack, min(int(br), max_rows))
    br = (br // pack) * pack
    rows_pad = _round_up(rows, pack)
    br = min(br, rows_pad)
    balance_cap = ((rows_pad // min_blocks) // pack) * pack
    if balance_cap >= pack:
        br = min(br, balance_cap)
    return max(pack, br)


def _nll_partial_kernel(logits_ref, target_ref, mask_ref, out_ref):
    """One grid step: (TR, Vp) logits + (TR, 1) target/mask -> one partial sum."""
    logits = logits_ref[...]                          # (TR, Vp), native dtype
    tgt = target_ref[...]                             # (TR, 1) int32
    msk = mask_ref[...].astype(jnp.float32)           # (TR, 1) f32

    # Gather logits[r, tgt[r]] via lane-iota compare + masked row-sum in the
    # NATIVE dtype (exact: each row has exactly one nonzero after the select);
    # only the (TR, 1) picked column is cast to f32 for accumulation.
    vocab_ids = jax.lax.broadcasted_iota(jnp.int32, logits.shape, 1)
    sel = jnp.where(vocab_ids == tgt, logits, jnp.zeros((), logits.dtype))
    picked = jnp.sum(sel, axis=1, keepdims=True).astype(jnp.float32)  # (TR, 1)

    partial = jnp.sum(-picked * msk)                  # scalar block partial, f32
    # Lane-dense (1, 8, 128) output tile; the wrapper reads [:, 0, 0].
    out_ref[...] = jnp.full(out_ref.shape, partial, dtype=out_ref.dtype)


@functools.partial(jax.jit, static_argnames=("block_rows",))
def language_model_criterion(logits, target, mask, *, block_rows=None):
    """
    logits: (N, T, V) float log-probabilities (any float dtype)
    target: (N, T_full) integer class ids     (truncated to T like PyTorch)
    mask:   (N, T_full) float mask
    returns: scalar f32 = sum(-logits[n,t,target[n,t]] * mask[n,t]) / N
    """
    N, T, V = logits.shape
    target = target[:, :T]
    mask = mask[:, :T]

    l_item = jnp.dtype(logits.dtype).itemsize
    m_item = jnp.dtype(mask.dtype).itemsize
    pack = max(_sublane_pack(l_item), _sublane_pack(m_item), 8)

    V_pad = _round_up(V, 128)
    R = N * T

    if block_rows is None:
        block_rows = _choose_block_rows(R, V_pad, l_item, pack)
    else:
        block_rows = max(pack, _round_up(int(block_rows), pack))

    # Keep logits/mask in their native dtypes; casts happen inside the kernel.
    logits_2d = logits.reshape(R, V)
    if V_pad != V:
        logits_2d = jnp.pad(logits_2d, ((0, 0), (0, V_pad - V)))
    target_1d = target.reshape(R).astype(jnp.int32)
    mask_1d = mask.reshape(R)

    # Pad rows so the grid tiles evenly; padded rows have mask = 0.
    R_pad = _round_up(R, block_rows)
    if R_pad != R:
        pad = R_pad - R
        logits_2d = jnp.pad(logits_2d, ((0, pad), (0, 0)))
        target_1d = jnp.pad(target_1d, ((0, pad),))
        mask_1d = jnp.pad(mask_1d, ((0, pad),))

    target_2d = target_1d.reshape(R_pad, 1)
    mask_2d = mask_1d.reshape(R_pad, 1)

    num_blocks = R_pad // block_rows

    # Scoped-VMEM budget derived from the actual double-buffered tiles, with
    # headroom under the chip's physical VMEM (64 MiB per-TC on v7x).
    logits_tile_b = block_rows * V_pad * l_item
    aux_tile_b = block_rows * 512 * 2          # lane-padded target+mask tiles
    derived = 2 * logits_tile_b + 2 * aux_tile_b + 2 * (8 * 128 * 4) + (4 << 20)
    vmem_limit = int(min(max(derived, 32 << 20),
                         _vmem_capacity_bytes() - (12 << 20)))

    bytes_accessed = (R_pad * V_pad * l_item
                      + R_pad * (4 + m_item)
                      + num_blocks * 8 * 128 * 4)
    cost = pl.CostEstimate(flops=2 * R_pad * V_pad,
                           transcendentals=0,
                           bytes_accessed=int(bytes_accessed))

    partials = pl.pallas_call(
        _nll_partial_kernel,
        out_shape=jax.ShapeDtypeStruct((num_blocks, 8, 128), jnp.float32),
        grid_spec=pltpu.PrefetchScalarGridSpec(
            num_scalar_prefetch=0,
            grid=(num_blocks,),
            in_specs=[
                pl.BlockSpec((block_rows, V_pad), lambda i: (i, 0)),
                pl.BlockSpec((block_rows, 1), lambda i: (i, 0)),
                pl.BlockSpec((block_rows, 1), lambda i: (i, 0)),
            ],
            out_specs=pl.BlockSpec((1, 8, 128), lambda i: (i, 0, 0)),
        ),
        compiler_params=pltpu.CompilerParams(
            dimension_semantics=("parallel",),
            vmem_limit_bytes=vmem_limit),
        cost_estimate=cost,
    )(logits_2d, target_2d, mask_2d)

    total = jnp.sum(partials[:, 0, 0])
    return total / jnp.float32(N)


def _reference(logits, target, mask):
    """Pure-JAX reference of the PyTorch forward."""
    N, T, V = logits.shape
    target = target[:, :T]
    mask = mask[:, :T]
    picked = jnp.take_along_axis(logits.astype(jnp.float32),
                                 target[..., None], axis=-1)[..., 0]
    return jnp.sum(-picked * mask.astype(jnp.float32)) / N


if __name__ == "__main__":
    key = jax.random.PRNGKey(0)

    def make_inputs(key, N, T, V, dtype=jnp.float32):
        k1, k2, k3 = jax.random.split(key, 3)
        raw = jax.random.normal(k1, (N, T, V), dtype=jnp.float32)
        logits = jax.nn.log_softmax(raw, axis=-1).astype(dtype)
        target = jax.random.randint(k2, (N, T), 0, V, dtype=jnp.int32)
        mask = (jax.random.uniform(k3, (N, T)) > 0.3).astype(jnp.float32)
        return logits, target, mask

    k_a, k_b, k_c = jax.random.split(key, 3)

    # Test 1: small (N=2, seq=8, vocab=128) f32, auto tile size.
    logits, target, mask = make_inputs(k_a, 2, 8, 128)
    out = jax.block_until_ready(language_model_criterion(logits, target, mask))
    ref = _reference(logits, target, mask)
    assert jnp.allclose(out, ref, rtol=1e-5, atol=1e-5), (out, ref)

    # Test 2: explicit small tile (multiple grid blocks, parallel partial sums).
    out2 = jax.block_until_ready(
        language_model_criterion(logits, target, mask, block_rows=8))
    assert jnp.allclose(out2, ref, rtol=1e-5, atol=1e-5), (out2, ref)

    # Test 3: non-divisible row count exercises the zero-mask row padding path.
    logits3, target3, mask3 = make_inputs(k_b, 2, 7, 128)
    out3 = jax.block_until_ready(
        language_model_criterion(logits3, target3, mask3))
    ref3 = _reference(logits3, target3, mask3)
    assert jnp.allclose(out3, ref3, rtol=1e-5, atol=1e-5), (out3, ref3)

    # Test 4: bf16 logits + non-multiple-of-128 vocab exercises the native
    # dtype select path, sublane packing (16) and the V lane-padding path.
    logits4, target4, mask4 = make_inputs(k_c, 2, 8, 100, dtype=jnp.bfloat16)
    out4 = jax.block_until_ready(
        language_model_criterion(logits4, target4, mask4))
    ref4 = _reference(logits4, target4, mask4)
    assert jnp.allclose(out4, ref4, rtol=1e-3, atol=1e-3), (out4, ref4)

    print("KERNEL_OK")
</pallas_src>

<mosaic_0001>
module attributes {stable_mosaic.version = 11 : i64} {
  func.func @_nll_partial_kernel(%arg0: i32, %arg1: memref<16x128xf32, #tpu.memory_space<vmem>>, %arg2: memref<16x1xi32, #tpu.memory_space<vmem>>, %arg3: memref<16x1xf32, #tpu.memory_space<vmem>>, %arg4: memref<1x8x128xf32, #tpu.memory_space<vmem>>) attributes {dimension_semantics = [#tpu.dimension_semantics<parallel>], iteration_bounds = array<i64: 1>, scalar_prefetch = 0 : i64, scratch_operands = 0 : i64, tpu.core_type = #tpu.core_type<tc>, window_params = [{transform_indices = @transform_0, window_bounds = array<i64: 16, 128>}, {transform_indices = @transform_1, window_bounds = array<i64: 16, 1>}, {transform_indices = @transform_2, window_bounds = array<i64: 16, 1>}, {transform_indices = @transform_3, window_bounds = array<i64: 1, 8, 128>}]} {
    %c0 = arith.constant 0 : index
    %c0_0 = arith.constant 0 : index
    %0 = vector.load %arg1[%c0, %c0_0] : memref<16x128xf32, #tpu.memory_space<vmem>>, vector<16x128xf32>
    %c0_1 = arith.constant 0 : index
    %c0_2 = arith.constant 0 : index
    %1 = vector.load %arg2[%c0_1, %c0_2] : memref<16x1xi32, #tpu.memory_space<vmem>>, vector<16x1xi32>
    %c0_3 = arith.constant 0 : index
    %c0_4 = arith.constant 0 : index
    %2 = vector.load %arg3[%c0_3, %c0_4] : memref<16x1xf32, #tpu.memory_space<vmem>>, vector<16x1xf32>
    %3 = tpu.iota {dimensions = array<i32: 1>} : vector<16x128xi32>
    %4 = vector.broadcast %1 : vector<16x1xi32> to vector<16x128xi32>
    %5 = arith.cmpi eq, %3, %4 : vector<16x128xi32>
    %cst = arith.constant 0.000000e+00 : f32
    %6 = vector.broadcast %cst : f32 to vector<16x128xf32>
    %7 = arith.select %5, %0, %6 : vector<16x128xi1>, vector<16x128xf32>
    %cst_5 = arith.constant dense<0.000000e+00> : vector<16xf32>
    %8 = vector.multi_reduction <add>, %7, %cst_5 [1] : vector<16x128xf32> to vector<16xf32>
    %9 = vector.shape_cast %8 : vector<16xf32> to vector<16x1xf32>
    %cst_6 = arith.constant 0.000000e+00 : f32
    %10 = vector.broadcast %cst_6 : f32 to vector<16x1xf32>
    %11 = arith.subf %10, %9 : vector<16x1xf32>
    %12 = arith.mulf %11, %2 : vector<16x1xf32>
    %13 = vector.shape_cast %12 : vector<16x1xf32> to vector<1x16x1xf32>
    %cst_7 = arith.constant dense<0.000000e+00> : vector<1xf32>
    %14 = vector.multi_reduction <add>, %13, %cst_7 [1, 2] : vector<1x16x1xf32> to vector<1xf32>
    %15 = vector.shape_cast %14 : vector<1xf32> to vector<1x1x1xf32>
    %16 = vector.extract %15[0, 0, 0] : f32 from vector<1x1x1xf32>
    %17 = vector.broadcast %16 : f32 to vector<1x8x128xf32>
    %c0_8 = arith.constant 0 : index
    %c0_9 = arith.constant 0 : index
    %c0_10 = arith.constant 0 : index
    %18 = vector.load %arg4[%c0_8, %c0_9, %c0_10] : memref<1x8x128xf32, #tpu.memory_space<vmem>>, vector<1x8x128xf32>
    tpu.vector_store %arg4[%c0_8, %c0_9, %c0_10], %17 {strides = array<i32>} : memref<1x8x128xf32, #tpu.memory_space<vmem>>, vector<1x8x128xf32>,
    return
  }
  func.func @transform_0(%arg0: i32) -> (i32, i32) {
    %c0_i32 = arith.constant 0 : i32
    %c0_i32_0 = arith.constant 0 : i32
    return %arg0, %c0_i32 : i32, i32
  }
  func.func @transform_1(%arg0: i32) -> (i32, i32) {
    %c0_i32 = arith.constant 0 : i32
    %c0_i32_0 = arith.constant 0 : i32
    return %arg0, %c0_i32 : i32, i32
  }
  func.func @transform_2(%arg0: i32) -> (i32, i32) {
    %c0_i32 = arith.constant 0 : i32
    %c0_i32_0 = arith.constant 0 : i32
    return %arg0, %c0_i32 : i32, i32
  }
  func.func @transform_3(%arg0: i32) -> (i32, i32, i32) {
    %c0_i32 = arith.constant 0 : i32
    %c0_i32_0 = arith.constant 0 : i32
    %c0_i32_1 = arith.constant 0 : i32
    return %arg0, %c0_i32, %c0_i32_0 : i32, i32, i32
  }
}

</mosaic_0001>

<llo_original>
// kernel: language_model_criterion.1
$region0: #{language_model_criterion.1}
  #allocation0 [shape = 'u32[]', space=smem, size = 0x4, offset = 0x4, fixed_abs, tag = 'smem constant byte address 0x4 - core index']
  #allocation1 [shape = 'u32[144,128]{1,0:T(1,128)}', space=vmem, size = 0x12000, scoped, tag = 'internal scratch']
  %s0 = inlined_call_operand.vmem [shape: f32[16,128], index: 0, kind: input, shape index: {}]
  %s1 = inlined_call_operand.vmem [shape: s32[16,1], index: 1, kind: input, shape index: {}]
  %s2 = inlined_call_operand.vmem [shape: f32[16,1], index: 2, kind: input, shape index: {}]
  %s3 = inlined_call_operand.vmem [shape: f32[1,8,128], index: 3, kind: output, shape index: {}]
  %s4 = sld [smem:[#allocation0]]
  $region22: #{language_model_criterion.1} parent=0
    _
  %s6 = ssub.s32 1, %s4
  %s7 = scalar_select 0, %s6, %s4
  // Predicated region
  $region2: #{language_model_criterion.1} parent=0 // pred_check
    _
  $region3: #{language_model_criterion.1} parent=0 // pred_check_branch
    %9 = sbr.rel (0) target = $region5
  $region4: #{language_model_criterion.1} parent=0 // pred_region
    _
  $region5: #{language_model_criterion.1} parent=0 // pred_fallthru
    _
  // Predicated region
  $region6: #{language_model_criterion.1} parent=0 // pred_check
    _
  $region7: #{language_model_criterion.1} parent=0 // pred_check_branch
    %11 = sbr.rel (0) target = $region9
  $region8: #{language_model_criterion.1} parent=0 // pred_region
    _
  $region9: #{language_model_criterion.1} parent=0 // pred_fallthru
    _
  // Predicated region
  $region10: #{language_model_criterion.1} parent=0 // pred_check
    _
  $region11: #{language_model_criterion.1} parent=0 // pred_check_branch
    %13 = sbr.rel (0) target = $region13
  $region12: #{language_model_criterion.1} parent=0 // pred_region
    _
  $region13: #{language_model_criterion.1} parent=0 // pred_fallthru
    _
  %v14 = vld [vmem:[%s0] sm:$0xff]
  %v15 = vld [vmem:[%s0 + $0x8] sm:$0xff]
  %v16 = vld [vmem:[%s1] sm:$0xff]
  %v17 = vld [vmem:[%s1 + $0x8] sm:$0xff]
  %v18 = vld [vmem:[%s2] sm:$0xff]
  %v19 = vld [vmem:[%s2 + $0x8] sm:$0xff]
  %v20 = vlaneseq
  %v21 = vand.u32 %v20, 127
  %22 = vset.pattern.permute.xlu0 0
  %23 = vperm.xlu0 %22, %v16
  %v24 = vpop.permute.xlu0 %23
  %25 = vset.pattern.permute.xlu0 0
  %26 = vperm.xlu0 %25, %v17
  %v27 = vpop.permute.xlu0 %26
  %vm28 = vcmp.eq.s32.totalorder %v21, %v24
  %vm29 = vcmp.eq.s32.totalorder %v21, %v27
  %v30 = vsel %vm28, %v14, 0.0
  %v31 = vsel %vm29, %v15, 0.0
  %32 = vadd.xlane.f32.xlu0 %v30
  %v33 = vpop.xlane.xlu0 %32
  %34 = vadd.xlane.f32.xlu0 %v31
  %v35 = vpop.xlane.xlu0 %34
  %v36 = vsub.f32 0.0, %v33
  %v37 = vsub.f32 0.0, %v35
  %v38 = vmul.f32 %v36, %v18
  %v39 = vmul.f32 %v37, %v19
  %vm40 = vcmask 7168
  %v41 = vsel %vm40, %v38, 0.0
  %v42 = vsel %vm40, %v39, 0.0
  %v43 = vadd.f32 %v41, %v42
  %44 = vadd.xlane.f32.xlu0 %v43
  %v45 = vpop.xlane.xlu0 %44
  %v46 = vrot.slane %v45, 4
  %v47 = vadd.f32 %v45, %v46
  %v48 = vrot.slane %v47, 2
  %v49 = vadd.f32 %v47, %v48
  %v50 = vrot.slane %v49, 1
  %v51 = vadd.f32 %v49, %v50
  %s52 = vtos %v51
  %v53 = vstv %s52
  %54 = vst [vmem:[%s3] sm:$0xff] %v53
  // Predicated region
  $region14: #{language_model_criterion.1} parent=0 // pred_check
    _
  $region15: #{language_model_criterion.1} parent=0 // pred_check_branch
    %56 = sbr.rel (0) target = $region17
  $region16: #{language_model_criterion.1} parent=0 // pred_region
    _
  $region17: #{language_model_criterion.1} parent=0 // pred_fallthru
    _
  // Predicated region
  $region18: #{language_model_criterion.1} parent=0 // pred_check
    _
  $region19: #{language_model_criterion.1} parent=0 // pred_check_branch
    %58 = sbr.rel (0) target = $region21
  $region20: #{language_model_criterion.1} parent=0 // pred_region
    _
  $region21: #{language_model_criterion.1} parent=0 // pred_fallthru
    _

</llo_original>
